<compile_context>
chip_gen: v7x
topology: tpu7x:2x2x1
jax: 0.10.0
libtpu: 0.0.40
codegen_flags: <defaults>
</compile_context>

<pallas_src>
import jax
import jax.numpy as jnp
import numpy as np
from jax.experimental import pallas as pl
from jax.experimental.pallas import tpu as pltpu


def _cdiv(a, b):
    return (a + b - 1) // b


def _round_up(a, b):
    return _cdiv(a, b) * b


def _yolo_loss_kernel(pred_ref, tgt_ref, out_ref, acc_ref):
    """pred_ref/tgt_ref: (30, R, 128) f32 channel-major tile.

    out_ref: (8, 128) per-outer-index partial-sum block.
    acc_ref: (R, 128) f32 persistent accumulator (per core).
    """
    k = pl.program_id(1)

    @pl.when(k == 0)
    def _init():
        acc_ref[...] = jnp.zeros_like(acc_ref)

    # ---- per-channel dense (R,128) loads -----------------------------------
    t0x, t0y, t0w, t0h, t0c = (tgt_ref[0], tgt_ref[1], tgt_ref[2],
                               tgt_ref[3], tgt_ref[4])
    t1x, t1y, t1w, t1h, t1c = (tgt_ref[5], tgt_ref[6], tgt_ref[7],
                               tgt_ref[8], tgt_ref[9])
    p0x, p0y, p0w, p0h, p0c = (pred_ref[0], pred_ref[1], pred_ref[2],
                               pred_ref[3], pred_ref[4])
    p1x, p1y, p1w, p1h, p1c = (pred_ref[5], pred_ref[6], pred_ref[7],
                               pred_ref[8], pred_ref[9])

    conf = t0c                       # target channel 4
    obj = conf > 0.0                 # cells containing an object
    noobj = conf == 0.0              # empty cells (and zero-padded cells)
    obj_f = obj.astype(jnp.float32)

    # ---- class loss (channels 10..29), multiply-masked (no NaN risk) -------
    cls_sq = jnp.zeros_like(conf)
    for c in range(10, 30):          # unrolled: running sum keeps vregs small
        d = tgt_ref[c] - pred_ref[c]
        cls_sq = cls_sq + d * d
    cls_term = cls_sq * obj_f

    # ---- no-object confidence loss (channels 4 & 9) ------------------------
    d4 = p0c - t0c
    d9 = p1c - t1c
    no_term = jnp.where(noobj, 0.5 * (d4 * d4 + d9 * d9), 0.0)

    # ---- IoU responsible-box selection (torch bugs reproduced) -------------
    def corners(bx, by, bw, bh):
        x1 = bx - 0.5 * bw
        x2 = bx + 0.5 * bw
        y1 = by - 0.5 * bh
        y2 = y1                      # faithful torch bug: y2 uses minus too
        return x1, y1, x2, y2

    px1_0, py1_0, px2_0, py2_0 = corners(p0x, p0y, p0w, p0h)
    px1_1, py1_1, px2_1, py2_1 = corners(p1x, p1y, p1w, p1h)
    tx1, ty1, tx2, ty2 = corners(t0x, t0y, t0w, t0h)   # target box = box 0

    def inter_with_target(x1, y1, x2, y2):
        return ((jnp.minimum(x2, tx2) - jnp.maximum(x1, tx1)) *
                (jnp.minimum(y2, ty2) - jnp.maximum(y1, ty1)))

    inter0 = inter_with_target(px1_0, py1_0, px2_0, py2_0)
    inter1 = inter_with_target(px1_1, py1_1, px2_1, py2_1)

    # torch broadcast bug: column 0 of the (2,2) iou matrix uses area1[0]
    # (first pred box's area) for BOTH rows.
    area1_0 = (px2_0 - px1_0) * (py2_0 - py1_0) + 100.0
    area2 = (tx2 - tx1) * (ty2 - ty1) + 100.0
    den = area2 + area1_0
    iou0 = inter0 / (den - inter0)
    iou1 = inter1 / (den - inter1)
    sel1 = iou1 > iou0               # responsible pred box == 1 (ties -> 0)

    def pick1(a, b):                 # box1 where sel1 else box0
        return jnp.where(sel1, b, a)

    rtx, rpx = pick1(t0x, t1x), pick1(p0x, p1x)
    rty, rpy = pick1(t0y, t1y), pick1(p0y, p1y)
    rtw, rpw = pick1(t0w, t1w), pick1(p0w, p1w)
    rth, rph = pick1(t0h, t1h), pick1(p0h, p1h)
    rtc, rpc = pick1(t0c, t1c), pick1(p0c, p1c)
    ntc, npc = pick1(t1c, t0c), pick1(p1c, p0c)   # NON-responsible confidences

    dx = rtx - rpx
    dy = rty - rpy
    dc = rtc - rpc
    dnc = ntc - npc

    # (sqrt(a)-sqrt(b))^2 == a + b - 2*sqrt(a*b): one EUP sqrt per term.
    # Deviates from torch only when both operands are negative (see header).
    w_term = rtw + rpw - 2.0 * jnp.sqrt(rtw * rpw)
    h_term = rth + rph - 2.0 * jnp.sqrt(rth * rph)

    # jnp.where (select, NOT multiply) so NaNs from sqrt on masked cells are
    # discarded exactly like the PyTorch boolean-mask gather.
    box_term = jnp.where(
        obj,
        5.0 * (dx * dx + dy * dy + w_term + h_term) + dc * dc + 0.5 * (dnc * dnc),
        0.0)

    acc_ref[...] += cls_term + no_term + box_term

    @pl.when(k == pl.num_programs(1) - 1)
    def _finalize():
        # One cross-sublane reduce per outer index; the 128-lane reduce and the
        # 1/N scaling happen in the wrapper.
        row = jnp.sum(acc_ref[...], axis=0, keepdims=True)     # (1, 128)
        out_ref[...] = jnp.broadcast_to(row, (8, 128))          # dense store


def yolo_loss(pred, target, *, tm=4096, num_core_splits=2):
    """pred, target: (B, S, S, 30) -> scalar loss (float32).

    tm: cells per grid tile (must be a multiple of 1024).
    num_core_splits: size of the outer "parallel" grid axis (2 lets v7x use
    both TensorCores; harmless elsewhere).
    """
    assert pred.shape == target.shape and pred.shape[-1] == 30
    assert tm % 1024 == 0, "tm must be a multiple of 1024 (sublane alignment)"
    B = pred.shape[0]
    C = pred.shape[-1]
    M = int(np.prod(pred.shape[:-1]))   # number of grid cells

    lanes = 128
    rows_needed = _cdiv(M, lanes)
    r_cap = tm // lanes                 # sublane rows per tile (multiple of 8)
    if rows_needed <= r_cap:
        r_tile = _round_up(rows_needed, 8)
        n_tiles = 1
    else:
        r_tile = r_cap
        n_tiles = _cdiv(rows_needed, r_tile)

    p = max(1, min(num_core_splits, n_tiles))   # outer (parallel) axis size
    n_tiles = _round_up(n_tiles, p)
    n_inner = n_tiles // p
    rows_total = n_tiles * r_tile
    m_pad = rows_total * lanes

    def to_slab(x):
        # (B,S,S,30) -> channel-major, sublane/lane-dense (30, rows, 128).
        # Padded cells are ZERO in both pred and target: conf==0 -> "noobj"
        # with d4==d9==0, so they contribute exactly 0 to the loss.
        x2 = x.reshape(M, C).astype(jnp.float32)
        x2 = jnp.pad(x2, ((0, m_pad - M), (0, 0)))
        return x2.T.reshape(C, rows_total, lanes)

    pcm = to_slab(pred)
    tcm = to_slab(target)

    out = pl.pallas_call(
        _yolo_loss_kernel,
        out_shape=jax.ShapeDtypeStruct((p * 8, lanes), jnp.float32),
        grid_spec=pltpu.PrefetchScalarGridSpec(
            num_scalar_prefetch=0,
            grid=(p, n_inner),
            in_specs=[
                pl.BlockSpec((C, r_tile, lanes),
                             lambda o, k: (0, o * n_inner + k, 0)),   # pred
                pl.BlockSpec((C, r_tile, lanes),
                             lambda o, k: (0, o * n_inner + k, 0)),   # target
            ],
            out_specs=pl.BlockSpec((8, lanes), lambda o, k: (o, 0)),
            scratch_shapes=[
                pltpu.VMEM((r_tile, lanes), jnp.float32),   # fused accumulator
            ],
        ),
        compiler_params=pltpu.CompilerParams(
            dimension_semantics=("parallel", "arbitrary")),
    )(pcm, tcm)

    # Each outer index wrote its partial sum replicated over 8 sublanes; take
    # sublane 0 of each group, reduce over lanes/groups, scale by 1/N.
    partials = out.reshape(p, 8, lanes)[:, 0, :]
    return jnp.sum(partials) / float(B)


# ---------------------------------------------------------------------------
# Pure-numpy reference mirroring the PyTorch code line-by-line (including the
# IoU bugs), used only for correctness checking in __main__.
def _ref_loss_np(pred, target):
    pred = np.asarray(pred, np.float32)
    target = np.asarray(target, np.float32)
    N = target.shape[0]
    fp = pred.reshape(-1, 30)
    ft = target.reshape(-1, 30)
    obj = ft[:, 4] > 0
    noobj = ft[:, 4] == 0

    no_t, no_p = ft[noobj], fp[noobj]
    co_t, co_p = ft[obj], fp[obj]

    loss_no = 0.5 * np.sum((no_p[:, [4, 9]] - no_t[:, [4, 9]]) ** 2)
    loss_class = np.sum((co_t[:, 10:] - co_p[:, 10:]) ** 2)

    cct = co_t[:, :10].reshape(-1, 5)
    ccp = co_p[:, :10].reshape(-1, 5)
    re_mask = np.zeros(cct.shape[0], bool)
    no_mask = np.zeros(cct.shape[0], bool)
    for i in range(0, cct.shape[0], 2):
        tb = cct[i]
        pb = ccp[i:i + 2]
        x1 = pb[:, 0] - pb[:, 2] / 2
        x2 = pb[:, 0] + pb[:, 2] / 2
        y1 = pb[:, 1] - pb[:, 3] / 2
        y2 = pb[:, 1] - pb[:, 3] / 2
        tx1 = tb[0] - tb[2] / 2
        tx2 = tb[0] + tb[2] / 2
        ty1 = tb[1] - tb[3] / 2
        ty2 = tb[1] - tb[3] / 2
        ltx = np.maximum(x1, tx1)
        lty = np.maximum(y1, ty1)
        rbx = np.minimum(x2, tx2)
        rby = np.minimum(y2, ty2)
        inter = (rbx - ltx) * (rby - lty)
        area1 = (x2 - x1) * (y2 - y1) + 100.0
        area2 = (tx2 - tx1) * (ty2 - ty1) + 100.0
        iou_col0 = inter / (area2 + area1[0] - inter)
        mi = int(np.argmax(iou_col0))
        re_mask[i + mi] = True
        no_mask[i + 1 - mi] = True

    tt, tp = cct[re_mask], ccp[re_mask]
    loss_x = 5.0 * np.sum((tt[:, 0] - tp[:, 0]) ** 2)
    loss_y = 5.0 * np.sum((tt[:, 1] - tp[:, 1]) ** 2)
    loss_w = 5.0 * np.sum((np.sqrt(tt[:, 2]) - np.sqrt(tp[:, 2])) ** 2)
    loss_h = 5.0 * np.sum((np.sqrt(tt[:, 3]) - np.sqrt(tp[:, 3])) ** 2)
    loss_c = np.sum((tt[:, 4] - tp[:, 4]) ** 2)
    nt, npd = cct[no_mask], ccp[no_mask]
    loss_nore = 0.5 * np.sum((nt[:, 4] - npd[:, 4]) ** 2)
    return (loss_no + loss_class + loss_x + loss_y + loss_w + loss_h
            + loss_c + loss_nore) / N


def _make_inputs(key, B, S, C):
    k1, k2, k3 = jax.random.split(key, 3)
    # Positive values everywhere so sqrt(w), sqrt(h) are well defined.
    pred = jax.random.uniform(k1, (B, S, S, C), jnp.float32, 0.1, 0.9)
    target = jax.random.uniform(k2, (B, S, S, C), jnp.float32, 0.1, 0.9)
    # ~30% of cells contain an object; empty cells get conf == 0.
    obj_mask = jax.random.bernoulli(k3, 0.3, (B, S, S))
    target = target.at[..., 4].set(jnp.where(obj_mask, target[..., 4], 0.0))
    return pred, target


if __name__ == "__main__":
    S, C = 7, 30
    key = jax.random.PRNGKey(0)
    ka, kb = jax.random.split(key)

    # Case 1: batch=2, default tm=4096 -> single tile, grid (1, 1).
    pred, target = _make_inputs(ka, 2, S, C)
    loss = jax.block_until_ready(yolo_loss(pred, target))
    ref = _ref_loss_np(np.array(pred), np.array(target))
    assert np.allclose(float(loss), float(ref), rtol=1e-3, atol=1e-4), (loss, ref)

    # Case 2: batch=64 with tm=1024 -> 4 tiles, grid (2, 2): exercises the
    # outer "parallel" axis AND multi-step accumulation along the inner axis.
    pred2, target2 = _make_inputs(kb, 64, S, C)
    loss2 = jax.block_until_ready(yolo_loss(pred2, target2, tm=1024))
    ref2 = _ref_loss_np(np.array(pred2), np.array(target2))
    assert np.allclose(float(loss2), float(ref2), rtol=1e-3, atol=1e-4), (loss2, ref2)

    print("KERNEL_OK")
</pallas_src>

<mosaic_0001>
module attributes {stable_mosaic.version = 11 : i64} {
  func.func @_yolo_loss_kernel(%arg0: i32, %arg1: i32, %arg2: memref<30x8x128xf32, #tpu.memory_space<vmem>>, %arg3: memref<30x8x128xf32, #tpu.memory_space<vmem>>, %arg4: memref<8x128xf32, #tpu.memory_space<vmem>>, %arg5: memref<8x128xf32, #tpu.memory_space<vmem>>) attributes {dimension_semantics = [#tpu.dimension_semantics<parallel>, #tpu.dimension_semantics<arbitrary>], iteration_bounds = array<i64: 1, 1>, scalar_prefetch = 0 : i64, scratch_operands = 1 : i64, tpu.core_type = #tpu.core_type<tc>, window_params = [{transform_indices = @transform_0, window_bounds = array<i64: 30, 8, 128>}, {transform_indices = @transform_1, window_bounds = array<i64: 30, 8, 128>}, {transform_indices = @transform_2, window_bounds = array<i64: 8, 128>}]} {
    %c0_i32 = arith.constant 0 : i32
    %0 = arith.cmpi eq, %arg1, %c0_i32 : i32
    %1 = arith.extui %0 : i1 to i32
    %c0_i32_0 = arith.constant 0 : i32
    %2 = arith.cmpi ne, %1, %c0_i32_0 : i32
    scf.if %2 {
      %cst_177 = arith.constant 0.000000e+00 : f32
      %308 = vector.broadcast %cst_177 : f32 to vector<8x128xf32>
      %c0_178 = arith.constant 0 : index
      %c0_179 = arith.constant 0 : index
      %309 = vector.load %arg5[%c0_178, %c0_179] : memref<8x128xf32, #tpu.memory_space<vmem>>, vector<8x128xf32>
      tpu.vector_store %arg5[%c0_178, %c0_179], %308 {strides = array<i32>} : memref<8x128xf32, #tpu.memory_space<vmem>>, vector<8x128xf32>,
    } else {
    }
    %c0 = arith.constant 0 : index
    %c0_1 = arith.constant 0 : index
    %c0_2 = arith.constant 0 : index
    %3 = vector.load %arg3[%c0, %c0_1, %c0_2] : memref<30x8x128xf32, #tpu.memory_space<vmem>>, vector<1x8x128xf32>
    %4 = vector.shape_cast %3 : vector<1x8x128xf32> to vector<8x128xf32>
    %c1 = arith.constant 1 : index
    %c0_3 = arith.constant 0 : index
    %c0_4 = arith.constant 0 : index
    %5 = vector.load %arg3[%c1, %c0_3, %c0_4] : memref<30x8x128xf32, #tpu.memory_space<vmem>>, vector<1x8x128xf32>
    %6 = vector.shape_cast %5 : vector<1x8x128xf32> to vector<8x128xf32>
    %c2 = arith.constant 2 : index
    %c0_5 = arith.constant 0 : index
    %c0_6 = arith.constant 0 : index
    %7 = vector.load %arg3[%c2, %c0_5, %c0_6] : memref<30x8x128xf32, #tpu.memory_space<vmem>>, vector<1x8x128xf32>
    %8 = vector.shape_cast %7 : vector<1x8x128xf32> to vector<8x128xf32>
    %c3 = arith.constant 3 : index
    %c0_7 = arith.constant 0 : index
    %c0_8 = arith.constant 0 : index
    %9 = vector.load %arg3[%c3, %c0_7, %c0_8] : memref<30x8x128xf32, #tpu.memory_space<vmem>>, vector<1x8x128xf32>
    %10 = vector.shape_cast %9 : vector<1x8x128xf32> to vector<8x128xf32>
    %c4 = arith.constant 4 : index
    %c0_9 = arith.constant 0 : index
    %c0_10 = arith.constant 0 : index
    %11 = vector.load %arg3[%c4, %c0_9, %c0_10] : memref<30x8x128xf32, #tpu.memory_space<vmem>>, vector<1x8x128xf32>
    %12 = vector.shape_cast %11 : vector<1x8x128xf32> to vector<8x128xf32>
    %c5 = arith.constant 5 : index
    %c0_11 = arith.constant 0 : index
    %c0_12 = arith.constant 0 : index
    %13 = vector.load %arg3[%c5, %c0_11, %c0_12] : memref<30x8x128xf32, #tpu.memory_space<vmem>>, vector<1x8x128xf32>
    %14 = vector.shape_cast %13 : vector<1x8x128xf32> to vector<8x128xf32>
    %c6 = arith.constant 6 : index
    %c0_13 = arith.constant 0 : index
    %c0_14 = arith.constant 0 : index
    %15 = vector.load %arg3[%c6, %c0_13, %c0_14] : memref<30x8x128xf32, #tpu.memory_space<vmem>>, vector<1x8x128xf32>
    %16 = vector.shape_cast %15 : vector<1x8x128xf32> to vector<8x128xf32>
    %c7 = arith.constant 7 : index
    %c0_15 = arith.constant 0 : index
    %c0_16 = arith.constant 0 : index
    %17 = vector.load %arg3[%c7, %c0_15, %c0_16] : memref<30x8x128xf32, #tpu.memory_space<vmem>>, vector<1x8x128xf32>
    %18 = vector.shape_cast %17 : vector<1x8x128xf32> to vector<8x128xf32>
    %c8 = arith.constant 8 : index
    %c0_17 = arith.constant 0 : index
    %c0_18 = arith.constant 0 : index
    %19 = vector.load %arg3[%c8, %c0_17, %c0_18] : memref<30x8x128xf32, #tpu.memory_space<vmem>>, vector<1x8x128xf32>
    %20 = vector.shape_cast %19 : vector<1x8x128xf32> to vector<8x128xf32>
    %c9 = arith.constant 9 : index
    %c0_19 = arith.constant 0 : index
    %c0_20 = arith.constant 0 : index
    %21 = vector.load %arg3[%c9, %c0_19, %c0_20] : memref<30x8x128xf32, #tpu.memory_space<vmem>>, vector<1x8x128xf32>
    %22 = vector.shape_cast %21 : vector<1x8x128xf32> to vector<8x128xf32>
    %c0_21 = arith.constant 0 : index
    %c0_22 = arith.constant 0 : index
    %c0_23 = arith.constant 0 : index
    %23 = vector.load %arg2[%c0_21, %c0_22, %c0_23] : memref<30x8x128xf32, #tpu.memory_space<vmem>>, vector<1x8x128xf32>
    %24 = vector.shape_cast %23 : vector<1x8x128xf32> to vector<8x128xf32>
    %c1_24 = arith.constant 1 : index
    %c0_25 = arith.constant 0 : index
    %c0_26 = arith.constant 0 : index
    %25 = vector.load %arg2[%c1_24, %c0_25, %c0_26] : memref<30x8x128xf32, #tpu.memory_space<vmem>>, vector<1x8x128xf32>
    %26 = vector.shape_cast %25 : vector<1x8x128xf32> to vector<8x128xf32>
    %c2_27 = arith.constant 2 : index
    %c0_28 = arith.constant 0 : index
    %c0_29 = arith.constant 0 : index
    %27 = vector.load %arg2[%c2_27, %c0_28, %c0_29] : memref<30x8x128xf32, #tpu.memory_space<vmem>>, vector<1x8x128xf32>
    %28 = vector.shape_cast %27 : vector<1x8x128xf32> to vector<8x128xf32>
    %c3_30 = arith.constant 3 : index
    %c0_31 = arith.constant 0 : index
    %c0_32 = arith.constant 0 : index
    %29 = vector.load %arg2[%c3_30, %c0_31, %c0_32] : memref<30x8x128xf32, #tpu.memory_space<vmem>>, vector<1x8x128xf32>
    %30 = vector.shape_cast %29 : vector<1x8x128xf32> to vector<8x128xf32>
    %c4_33 = arith.constant 4 : index
    %c0_34 = arith.constant 0 : index
    %c0_35 = arith.constant 0 : index
    %31 = vector.load %arg2[%c4_33, %c0_34, %c0_35] : memref<30x8x128xf32, #tpu.memory_space<vmem>>, vector<1x8x128xf32>
    %32 = vector.shape_cast %31 : vector<1x8x128xf32> to vector<8x128xf32>
    %c5_36 = arith.constant 5 : index
    %c0_37 = arith.constant 0 : index
    %c0_38 = arith.constant 0 : index
    %33 = vector.load %arg2[%c5_36, %c0_37, %c0_38] : memref<30x8x128xf32, #tpu.memory_space<vmem>>, vector<1x8x128xf32>
    %34 = vector.shape_cast %33 : vector<1x8x128xf32> to vector<8x128xf32>
    %c6_39 = arith.constant 6 : index
    %c0_40 = arith.constant 0 : index
    %c0_41 = arith.constant 0 : index
    %35 = vector.load %arg2[%c6_39, %c0_40, %c0_41] : memref<30x8x128xf32, #tpu.memory_space<vmem>>, vector<1x8x128xf32>
    %36 = vector.shape_cast %35 : vector<1x8x128xf32> to vector<8x128xf32>
    %c7_42 = arith.constant 7 : index
    %c0_43 = arith.constant 0 : index
    %c0_44 = arith.constant 0 : index
    %37 = vector.load %arg2[%c7_42, %c0_43, %c0_44] : memref<30x8x128xf32, #tpu.memory_space<vmem>>, vector<1x8x128xf32>
    %38 = vector.shape_cast %37 : vector<1x8x128xf32> to vector<8x128xf32>
    %c8_45 = arith.constant 8 : index
    %c0_46 = arith.constant 0 : index
    %c0_47 = arith.constant 0 : index
    %39 = vector.load %arg2[%c8_45, %c0_46, %c0_47] : memref<30x8x128xf32, #tpu.memory_space<vmem>>, vector<1x8x128xf32>
    %40 = vector.shape_cast %39 : vector<1x8x128xf32> to vector<8x128xf32>
    %c9_48 = arith.constant 9 : index
    %c0_49 = arith.constant 0 : index
    %c0_50 = arith.constant 0 : index
    %41 = vector.load %arg2[%c9_48, %c0_49, %c0_50] : memref<30x8x128xf32, #tpu.memory_space<vmem>>, vector<1x8x128xf32>
    %42 = vector.shape_cast %41 : vector<1x8x128xf32> to vector<8x128xf32>
    %cst = arith.constant 0.000000e+00 : f32
    %43 = vector.broadcast %cst : f32 to vector<8x128xf32>
    %44 = arith.cmpf ogt, %12, %43 : vector<8x128xf32>
    %cst_51 = arith.constant 0.000000e+00 : f32
    %45 = vector.broadcast %cst_51 : f32 to vector<8x128xf32>
    %46 = arith.cmpf oeq, %12, %45 : vector<8x128xf32>
    %47 = arith.extui %44 : vector<8x128xi1> to vector<8x128xi32>
    %48 = arith.sitofp %47 : vector<8x128xi32> to vector<8x128xf32>
    %cst_52 = arith.constant 0.000000e+00 : f32
    %49 = vector.broadcast %cst_52 : f32 to vector<8x128xf32>
    %c10 = arith.constant 10 : index
    %c0_53 = arith.constant 0 : index
    %c0_54 = arith.constant 0 : index
    %50 = vector.load %arg3[%c10, %c0_53, %c0_54] : memref<30x8x128xf32, #tpu.memory_space<vmem>>, vector<1x8x128xf32>
    %51 = vector.shape_cast %50 : vector<1x8x128xf32> to vector<8x128xf32>
    %c10_55 = arith.constant 10 : index
    %c0_56 = arith.constant 0 : index
    %c0_57 = arith.constant 0 : index
    %52 = vector.load %arg2[%c10_55, %c0_56, %c0_57] : memref<30x8x128xf32, #tpu.memory_space<vmem>>, vector<1x8x128xf32>
    %53 = vector.shape_cast %52 : vector<1x8x128xf32> to vector<8x128xf32>
    %54 = arith.subf %51, %53 : vector<8x128xf32>
    %55 = arith.mulf %54, %54 : vector<8x128xf32>
    %56 = arith.addf %49, %55 : vector<8x128xf32>
    %c11 = arith.constant 11 : index
    %c0_58 = arith.constant 0 : index
    %c0_59 = arith.constant 0 : index
    %57 = vector.load %arg3[%c11, %c0_58, %c0_59] : memref<30x8x128xf32, #tpu.memory_space<vmem>>, vector<1x8x128xf32>
    %58 = vector.shape_cast %57 : vector<1x8x128xf32> to vector<8x128xf32>
    %c11_60 = arith.constant 11 : index
    %c0_61 = arith.constant 0 : index
    %c0_62 = arith.constant 0 : index
    %59 = vector.load %arg2[%c11_60, %c0_61, %c0_62] : memref<30x8x128xf32, #tpu.memory_space<vmem>>, vector<1x8x128xf32>
    %60 = vector.shape_cast %59 : vector<1x8x128xf32> to vector<8x128xf32>
    %61 = arith.subf %58, %60 : vector<8x128xf32>
    %62 = arith.mulf %61, %61 : vector<8x128xf32>
    %63 = arith.addf %56, %62 : vector<8x128xf32>
    %c12 = arith.constant 12 : index
    %c0_63 = arith.constant 0 : index
    %c0_64 = arith.constant 0 : index
    %64 = vector.load %arg3[%c12, %c0_63, %c0_64] : memref<30x8x128xf32, #tpu.memory_space<vmem>>, vector<1x8x128xf32>
    %65 = vector.shape_cast %64 : vector<1x8x128xf32> to vector<8x128xf32>
    %c12_65 = arith.constant 12 : index
    %c0_66 = arith.constant 0 : index
    %c0_67 = arith.constant 0 : index
    %66 = vector.load %arg2[%c12_65, %c0_66, %c0_67] : memref<30x8x128xf32, #tpu.memory_space<vmem>>, vector<1x8x128xf32>
    %67 = vector.shape_cast %66 : vector<1x8x128xf32> to vector<8x128xf32>
    %68 = arith.subf %65, %67 : vector<8x128xf32>
    %69 = arith.mulf %68, %68 : vector<8x128xf32>
    %70 = arith.addf %63, %69 : vector<8x128xf32>
    %c13 = arith.constant 13 : index
    %c0_68 = arith.constant 0 : index
    %c0_69 = arith.constant 0 : index
    %71 = vector.load %arg3[%c13, %c0_68, %c0_69] : memref<30x8x128xf32, #tpu.memory_space<vmem>>, vector<1x8x128xf32>
    %72 = vector.shape_cast %71 : vector<1x8x128xf32> to vector<8x128xf32>
    %c13_70 = arith.constant 13 : index
    %c0_71 = arith.constant 0 : index
    %c0_72 = arith.constant 0 : index
    %73 = vector.load %arg2[%c13_70, %c0_71, %c0_72] : memref<30x8x128xf32, #tpu.memory_space<vmem>>, vector<1x8x128xf32>
    %74 = vector.shape_cast %73 : vector<1x8x128xf32> to vector<8x128xf32>
    %75 = arith.subf %72, %74 : vector<8x128xf32>
    %76 = arith.mulf %75, %75 : vector<8x128xf32>
    %77 = arith.addf %70, %76 : vector<8x128xf32>
    %c14 = arith.constant 14 : index
    %c0_73 = arith.constant 0 : index
    %c0_74 = arith.constant 0 : index
    %78 = vector.load %arg3[%c14, %c0_73, %c0_74] : memref<30x8x128xf32, #tpu.memory_space<vmem>>, vector<1x8x128xf32>
    %79 = vector.shape_cast %78 : vector<1x8x128xf32> to vector<8x128xf32>
    %c14_75 = arith.constant 14 : index
    %c0_76 = arith.constant 0 : index
    %c0_77 = arith.constant 0 : index
    %80 = vector.load %arg2[%c14_75, %c0_76, %c0_77] : memref<30x8x128xf32, #tpu.memory_space<vmem>>, vector<1x8x128xf32>
    %81 = vector.shape_cast %80 : vector<1x8x128xf32> to vector<8x128xf32>
    %82 = arith.subf %79, %81 : vector<8x128xf32>
    %83 = arith.mulf %82, %82 : vector<8x128xf32>
    %84 = arith.addf %77, %83 : vector<8x128xf32>
    %c15 = arith.constant 15 : index
    %c0_78 = arith.constant 0 : index
    %c0_79 = arith.constant 0 : index
    %85 = vector.load %arg3[%c15, %c0_78, %c0_79] : memref<30x8x128xf32, #tpu.memory_space<vmem>>, vector<1x8x128xf32>
    %86 = vector.shape_cast %85 : vector<1x8x128xf32> to vector<8x128xf32>
    %c15_80 = arith.constant 15 : index
    %c0_81 = arith.constant 0 : index
    %c0_82 = arith.constant 0 : index
    %87 = vector.load %arg2[%c15_80, %c0_81, %c0_82] : memref<30x8x128xf32, #tpu.memory_space<vmem>>, vector<1x8x128xf32>
    %88 = vector.shape_cast %87 : vector<1x8x128xf32> to vector<8x128xf32>
    %89 = arith.subf %86, %88 : vector<8x128xf32>
    %90 = arith.mulf %89, %89 : vector<8x128xf32>
    %91 = arith.addf %84, %90 : vector<8x128xf32>
    %c16 = arith.constant 16 : index
    %c0_83 = arith.constant 0 : index
    %c0_84 = arith.constant 0 : index
    %92 = vector.load %arg3[%c16, %c0_83, %c0_84] : memref<30x8x128xf32, #tpu.memory_space<vmem>>, vector<1x8x128xf32>
    %93 = vector.shape_cast %92 : vector<1x8x128xf32> to vector<8x128xf32>
    %c16_85 = arith.constant 16 : index
    %c0_86 = arith.constant 0 : index
    %c0_87 = arith.constant 0 : index
    %94 = vector.load %arg2[%c16_85, %c0_86, %c0_87] : memref<30x8x128xf32, #tpu.memory_space<vmem>>, vector<1x8x128xf32>
    %95 = vector.shape_cast %94 : vector<1x8x128xf32> to vector<8x128xf32>
    %96 = arith.subf %93, %95 : vector<8x128xf32>
    %97 = arith.mulf %96, %96 : vector<8x128xf32>
    %98 = arith.addf %91, %97 : vector<8x128xf32>
    %c17 = arith.constant 17 : index
    %c0_88 = arith.constant 0 : index
    %c0_89 = arith.constant 0 : index
    %99 = vector.load %arg3[%c17, %c0_88, %c0_89] : memref<30x8x128xf32, #tpu.memory_space<vmem>>, vector<1x8x128xf32>
    %100 = vector.shape_cast %99 : vector<1x8x128xf32> to vector<8x128xf32>
    %c17_90 = arith.constant 17 : index
    %c0_91 = arith.constant 0 : index
    %c0_92 = arith.constant 0 : index
    %101 = vector.load %arg2[%c17_90, %c0_91, %c0_92] : memref<30x8x128xf32, #tpu.memory_space<vmem>>, vector<1x8x128xf32>
    %102 = vector.shape_cast %101 : vector<1x8x128xf32> to vector<8x128xf32>
    %103 = arith.subf %100, %102 : vector<8x128xf32>
    %104 = arith.mulf %103, %103 : vector<8x128xf32>
    %105 = arith.addf %98, %104 : vector<8x128xf32>
    %c18 = arith.constant 18 : index
    %c0_93 = arith.constant 0 : index
    %c0_94 = arith.constant 0 : index
    %106 = vector.load %arg3[%c18, %c0_93, %c0_94] : memref<30x8x128xf32, #tpu.memory_space<vmem>>, vector<1x8x128xf32>
    %107 = vector.shape_cast %106 : vector<1x8x128xf32> to vector<8x128xf32>
    %c18_95 = arith.constant 18 : index
    %c0_96 = arith.constant 0 : index
    %c0_97 = arith.constant 0 : index
    %108 = vector.load %arg2[%c18_95, %c0_96, %c0_97] : memref<30x8x128xf32, #tpu.memory_space<vmem>>, vector<1x8x128xf32>
    %109 = vector.shape_cast %108 : vector<1x8x128xf32> to vector<8x128xf32>
    %110 = arith.subf %107, %109 : vector<8x128xf32>
    %111 = arith.mulf %110, %110 : vector<8x128xf32>
    %112 = arith.addf %105, %111 : vector<8x128xf32>
    %c19 = arith.constant 19 : index
    %c0_98 = arith.constant 0 : index
    %c0_99 = arith.constant 0 : index
    %113 = vector.load %arg3[%c19, %c0_98, %c0_99] : memref<30x8x128xf32, #tpu.memory_space<vmem>>, vector<1x8x128xf32>
    %114 = vector.shape_cast %113 : vector<1x8x128xf32> to vector<8x128xf32>
    %c19_100 = arith.constant 19 : index
    %c0_101 = arith.constant 0 : index
    %c0_102 = arith.constant 0 : index
    %115 = vector.load %arg2[%c19_100, %c0_101, %c0_102] : memref<30x8x128xf32, #tpu.memory_space<vmem>>, vector<1x8x128xf32>
    %116 = vector.shape_cast %115 : vector<1x8x128xf32> to vector<8x128xf32>
    %117 = arith.subf %114, %116 : vector<8x128xf32>
    %118 = arith.mulf %117, %117 : vector<8x128xf32>
    %119 = arith.addf %112, %118 : vector<8x128xf32>
    %c20 = arith.constant 20 : index
    %c0_103 = arith.constant 0 : index
    %c0_104 = arith.constant 0 : index
    %120 = vector.load %arg3[%c20, %c0_103, %c0_104] : memref<30x8x128xf32, #tpu.memory_space<vmem>>, vector<1x8x128xf32>
    %121 = vector.shape_cast %120 : vector<1x8x128xf32> to vector<8x128xf32>
    %c20_105 = arith.constant 20 : index
    %c0_106 = arith.constant 0 : index
    %c0_107 = arith.constant 0 : index
    %122 = vector.load %arg2[%c20_105, %c0_106, %c0_107] : memref<30x8x128xf32, #tpu.memory_space<vmem>>, vector<1x8x128xf32>
    %123 = vector.shape_cast %122 : vector<1x8x128xf32> to vector<8x128xf32>
    %124 = arith.subf %121, %123 : vector<8x128xf32>
    %125 = arith.mulf %124, %124 : vector<8x128xf32>
    %126 = arith.addf %119, %125 : vector<8x128xf32>
    %c21 = arith.constant 21 : index
    %c0_108 = arith.constant 0 : index
    %c0_109 = arith.constant 0 : index
    %127 = vector.load %arg3[%c21, %c0_108, %c0_109] : memref<30x8x128xf32, #tpu.memory_space<vmem>>, vector<1x8x128xf32>
    %128 = vector.shape_cast %127 : vector<1x8x128xf32> to vector<8x128xf32>
    %c21_110 = arith.constant 21 : index
    %c0_111 = arith.constant 0 : index
    %c0_112 = arith.constant 0 : index
    %129 = vector.load %arg2[%c21_110, %c0_111, %c0_112] : memref<30x8x128xf32, #tpu.memory_space<vmem>>, vector<1x8x128xf32>
    %130 = vector.shape_cast %129 : vector<1x8x128xf32> to vector<8x128xf32>
    %131 = arith.subf %128, %130 : vector<8x128xf32>
    %132 = arith.mulf %131, %131 : vector<8x128xf32>
    %133 = arith.addf %126, %132 : vector<8x128xf32>
    %c22 = arith.constant 22 : index
    %c0_113 = arith.constant 0 : index
    %c0_114 = arith.constant 0 : index
    %134 = vector.load %arg3[%c22, %c0_113, %c0_114] : memref<30x8x128xf32, #tpu.memory_space<vmem>>, vector<1x8x128xf32>
    %135 = vector.shape_cast %134 : vector<1x8x128xf32> to vector<8x128xf32>
    %c22_115 = arith.constant 22 : index
    %c0_116 = arith.constant 0 : index
    %c0_117 = arith.constant 0 : index
    %136 = vector.load %arg2[%c22_115, %c0_116, %c0_117] : memref<30x8x128xf32, #tpu.memory_space<vmem>>, vector<1x8x128xf32>
    %137 = vector.shape_cast %136 : vector<1x8x128xf32> to vector<8x128xf32>
    %138 = arith.subf %135, %137 : vector<8x128xf32>
    %139 = arith.mulf %138, %138 : vector<8x128xf32>
    %140 = arith.addf %133, %139 : vector<8x128xf32>
    %c23 = arith.constant 23 : index
    %c0_118 = arith.constant 0 : index
    %c0_119 = arith.constant 0 : index
    %141 = vector.load %arg3[%c23, %c0_118, %c0_119] : memref<30x8x128xf32, #tpu.memory_space<vmem>>, vector<1x8x128xf32>
    %142 = vector.shape_cast %141 : vector<1x8x128xf32> to vector<8x128xf32>
    %c23_120 = arith.constant 23 : index
    %c0_121 = arith.constant 0 : index
    %c0_122 = arith.constant 0 : index
    %143 = vector.load %arg2[%c23_120, %c0_121, %c0_122] : memref<30x8x128xf32, #tpu.memory_space<vmem>>, vector<1x8x128xf32>
    %144 = vector.shape_cast %143 : vector<1x8x128xf32> to vector<8x128xf32>
    %145 = arith.subf %142, %144 : vector<8x128xf32>
    %146 = arith.mulf %145, %145 : vector<8x128xf32>
    %147 = arith.addf %140, %146 : vector<8x128xf32>
    %c24 = arith.constant 24 : index
    %c0_123 = arith.constant 0 : index
    %c0_124 = arith.constant 0 : index
    %148 = vector.load %arg3[%c24, %c0_123, %c0_124] : memref<30x8x128xf32, #tpu.memory_space<vmem>>, vector<1x8x128xf32>
    %149 = vector.shape_cast %148 : vector<1x8x128xf32> to vector<8x128xf32>
    %c24_125 = arith.constant 24 : index
    %c0_126 = arith.constant 0 : index
    %c0_127 = arith.constant 0 : index
    %150 = vector.load %arg2[%c24_125, %c0_126, %c0_127] : memref<30x8x128xf32, #tpu.memory_space<vmem>>, vector<1x8x128xf32>
    %151 = vector.shape_cast %150 : vector<1x8x128xf32> to vector<8x128xf32>
    %152 = arith.subf %149, %151 : vector<8x128xf32>
    %153 = arith.mulf %152, %152 : vector<8x128xf32>
    %154 = arith.addf %147, %153 : vector<8x128xf32>
    %c25 = arith.constant 25 : index
    %c0_128 = arith.constant 0 : index
    %c0_129 = arith.constant 0 : index
    %155 = vector.load %arg3[%c25, %c0_128, %c0_129] : memref<30x8x128xf32, #tpu.memory_space<vmem>>, vector<1x8x128xf32>
    %156 = vector.shape_cast %155 : vector<1x8x128xf32> to vector<8x128xf32>
    %c25_130 = arith.constant 25 : index
    %c0_131 = arith.constant 0 : index
    %c0_132 = arith.constant 0 : index
    %157 = vector.load %arg2[%c25_130, %c0_131, %c0_132] : memref<30x8x128xf32, #tpu.memory_space<vmem>>, vector<1x8x128xf32>
    %158 = vector.shape_cast %157 : vector<1x8x128xf32> to vector<8x128xf32>
    %159 = arith.subf %156, %158 : vector<8x128xf32>
    %160 = arith.mulf %159, %159 : vector<8x128xf32>
    %161 = arith.addf %154, %160 : vector<8x128xf32>
    %c26 = arith.constant 26 : index
    %c0_133 = arith.constant 0 : index
    %c0_134 = arith.constant 0 : index
    %162 = vector.load %arg3[%c26, %c0_133, %c0_134] : memref<30x8x128xf32, #tpu.memory_space<vmem>>, vector<1x8x128xf32>
    %163 = vector.shape_cast %162 : vector<1x8x128xf32> to vector<8x128xf32>
    %c26_135 = arith.constant 26 : index
    %c0_136 = arith.constant 0 : index
    %c0_137 = arith.constant 0 : index
    %164 = vector.load %arg2[%c26_135, %c0_136, %c0_137] : memref<30x8x128xf32, #tpu.memory_space<vmem>>, vector<1x8x128xf32>
    %165 = vector.shape_cast %164 : vector<1x8x128xf32> to vector<8x128xf32>
    %166 = arith.subf %163, %165 : vector<8x128xf32>
    %167 = arith.mulf %166, %166 : vector<8x128xf32>
    %168 = arith.addf %161, %167 : vector<8x128xf32>
    %c27 = arith.constant 27 : index
    %c0_138 = arith.constant 0 : index
    %c0_139 = arith.constant 0 : index
    %169 = vector.load %arg3[%c27, %c0_138, %c0_139] : memref<30x8x128xf32, #tpu.memory_space<vmem>>, vector<1x8x128xf32>
    %170 = vector.shape_cast %169 : vector<1x8x128xf32> to vector<8x128xf32>
    %c27_140 = arith.constant 27 : index
    %c0_141 = arith.constant 0 : index
    %c0_142 = arith.constant 0 : index
    %171 = vector.load %arg2[%c27_140, %c0_141, %c0_142] : memref<30x8x128xf32, #tpu.memory_space<vmem>>, vector<1x8x128xf32>
    %172 = vector.shape_cast %171 : vector<1x8x128xf32> to vector<8x128xf32>
    %173 = arith.subf %170, %172 : vector<8x128xf32>
    %174 = arith.mulf %173, %173 : vector<8x128xf32>
    %175 = arith.addf %168, %174 : vector<8x128xf32>
    %c28 = arith.constant 28 : index
    %c0_143 = arith.constant 0 : index
    %c0_144 = arith.constant 0 : index
    %176 = vector.load %arg3[%c28, %c0_143, %c0_144] : memref<30x8x128xf32, #tpu.memory_space<vmem>>, vector<1x8x128xf32>
    %177 = vector.shape_cast %176 : vector<1x8x128xf32> to vector<8x128xf32>
    %c28_145 = arith.constant 28 : index
    %c0_146 = arith.constant 0 : index
    %c0_147 = arith.constant 0 : index
    %178 = vector.load %arg2[%c28_145, %c0_146, %c0_147] : memref<30x8x128xf32, #tpu.memory_space<vmem>>, vector<1x8x128xf32>
    %179 = vector.shape_cast %178 : vector<1x8x128xf32> to vector<8x128xf32>
    %180 = arith.subf %177, %179 : vector<8x128xf32>
    %181 = arith.mulf %180, %180 : vector<8x128xf32>
    %182 = arith.addf %175, %181 : vector<8x128xf32>
    %c29 = arith.constant 29 : index
    %c0_148 = arith.constant 0 : index
    %c0_149 = arith.constant 0 : index
    %183 = vector.load %arg3[%c29, %c0_148, %c0_149] : memref<30x8x128xf32, #tpu.memory_space<vmem>>, vector<1x8x128xf32>
    %184 = vector.shape_cast %183 : vector<1x8x128xf32> to vector<8x128xf32>
    %c29_150 = arith.constant 29 : index
    %c0_151 = arith.constant 0 : index
    %c0_152 = arith.constant 0 : index
    %185 = vector.load %arg2[%c29_150, %c0_151, %c0_152] : memref<30x8x128xf32, #tpu.memory_space<vmem>>, vector<1x8x128xf32>
    %186 = vector.shape_cast %185 : vector<1x8x128xf32> to vector<8x128xf32>
    %187 = arith.subf %184, %186 : vector<8x128xf32>
    %188 = arith.mulf %187, %187 : vector<8x128xf32>
    %189 = arith.addf %182, %188 : vector<8x128xf32>
    %190 = arith.mulf %189, %48 : vector<8x128xf32>
    %191 = arith.subf %32, %12 : vector<8x128xf32>
    %192 = arith.subf %42, %22 : vector<8x128xf32>
    %193 = arith.mulf %191, %191 : vector<8x128xf32>
    %194 = arith.mulf %192, %192 : vector<8x128xf32>
    %195 = arith.addf %193, %194 : vector<8x128xf32>
    %cst_153 = arith.constant 5.000000e-01 : f32
    %196 = vector.broadcast %cst_153 : f32 to vector<8x128xf32>
    %197 = arith.mulf %196, %195 : vector<8x128xf32>
    %cst_154 = arith.constant 0.000000e+00 : f32
    %198 = vector.broadcast %cst_154 : f32 to vector<8x128xf32>
    %199 = arith.select %46, %197, %198 : vector<8x128xi1>, vector<8x128xf32>
    %cst_155 = arith.constant 5.000000e-01 : f32
    %200 = vector.broadcast %cst_155 : f32 to vector<8x128xf32>
    %201 = arith.mulf %200, %28 : vector<8x128xf32>
    %202 = arith.subf %24, %201 : vector<8x128xf32>
    %cst_156 = arith.constant 5.000000e-01 : f32
    %203 = vector.broadcast %cst_156 : f32 to vector<8x128xf32>
    %204 = arith.mulf %203, %28 : vector<8x128xf32>
    %205 = arith.addf %24, %204 : vector<8x128xf32>
    %cst_157 = arith.constant 5.000000e-01 : f32
    %206 = vector.broadcast %cst_157 : f32 to vector<8x128xf32>
    %207 = arith.mulf %206, %30 : vector<8x128xf32>
    %208 = arith.subf %26, %207 : vector<8x128xf32>
    %cst_158 = arith.constant 5.000000e-01 : f32
    %209 = vector.broadcast %cst_158 : f32 to vector<8x128xf32>
    %210 = arith.mulf %209, %38 : vector<8x128xf32>
    %211 = arith.subf %34, %210 : vector<8x128xf32>
    %cst_159 = arith.constant 5.000000e-01 : f32
    %212 = vector.broadcast %cst_159 : f32 to vector<8x128xf32>
    %213 = arith.mulf %212, %38 : vector<8x128xf32>
    %214 = arith.addf %34, %213 : vector<8x128xf32>
    %cst_160 = arith.constant 5.000000e-01 : f32
    %215 = vector.broadcast %cst_160 : f32 to vector<8x128xf32>
    %216 = arith.mulf %215, %40 : vector<8x128xf32>
    %217 = arith.subf %36, %216 : vector<8x128xf32>
    %cst_161 = arith.constant 5.000000e-01 : f32
    %218 = vector.broadcast %cst_161 : f32 to vector<8x128xf32>
    %219 = arith.mulf %218, %8 : vector<8x128xf32>
    %220 = arith.subf %4, %219 : vector<8x128xf32>
    %cst_162 = arith.constant 5.000000e-01 : f32
    %221 = vector.broadcast %cst_162 : f32 to vector<8x128xf32>
    %222 = arith.mulf %221, %8 : vector<8x128xf32>
    %223 = arith.addf %4, %222 : vector<8x128xf32>
    %cst_163 = arith.constant 5.000000e-01 : f32
    %224 = vector.broadcast %cst_163 : f32 to vector<8x128xf32>
    %225 = arith.mulf %224, %10 : vector<8x128xf32>
    %226 = arith.subf %6, %225 : vector<8x128xf32>
    %227 = arith.minimumf %205, %223 : vector<8x128xf32>
    %228 = arith.maximumf %202, %220 : vector<8x128xf32>
    %229 = arith.subf %227, %228 : vector<8x128xf32>
    %230 = arith.minimumf %208, %226 : vector<8x128xf32>
    %231 = arith.maximumf %208, %226 : vector<8x128xf32>
    %232 = arith.subf %230, %231 : vector<8x128xf32>
    %233 = arith.mulf %229, %232 : vector<8x128xf32>
    %234 = arith.minimumf %214, %223 : vector<8x128xf32>
    %235 = arith.maximumf %211, %220 : vector<8x128xf32>
    %236 = arith.subf %234, %235 : vector<8x128xf32>
    %237 = arith.minimumf %217, %226 : vector<8x128xf32>
    %238 = arith.maximumf %217, %226 : vector<8x128xf32>
    %239 = arith.subf %237, %238 : vector<8x128xf32>
    %240 = arith.mulf %236, %239 : vector<8x128xf32>
    %241 = arith.subf %205, %202 : vector<8x128xf32>
    %242 = arith.subf %208, %208 : vector<8x128xf32>
    %243 = arith.mulf %241, %242 : vector<8x128xf32>
    %cst_164 = arith.constant 1.000000e+02 : f32
    %244 = vector.broadcast %cst_164 : f32 to vector<8x128xf32>
    %245 = arith.addf %243, %244 : vector<8x128xf32>
    %246 = arith.subf %223, %220 : vector<8x128xf32>
    %247 = arith.subf %226, %226 : vector<8x128xf32>
    %248 = arith.mulf %246, %247 : vector<8x128xf32>
    %cst_165 = arith.constant 1.000000e+02 : f32
    %249 = vector.broadcast %cst_165 : f32 to vector<8x128xf32>
    %250 = arith.addf %248, %249 : vector<8x128xf32>
    %251 = arith.addf %250, %245 : vector<8x128xf32>
    %252 = arith.subf %251, %233 : vector<8x128xf32>
    %253 = arith.divf %233, %252 : vector<8x128xf32>
    %254 = arith.subf %251, %240 : vector<8x128xf32>
    %255 = arith.divf %240, %254 : vector<8x128xf32>
    %256 = arith.cmpf ogt, %255, %253 : vector<8x128xf32>
    %257 = arith.select %256, %14, %4 : vector<8x128xi1>, vector<8x128xf32>
    %258 = arith.select %256, %34, %24 : vector<8x128xi1>, vector<8x128xf32>
    %259 = arith.select %256, %16, %6 : vector<8x128xi1>, vector<8x128xf32>
    %260 = arith.select %256, %36, %26 : vector<8x128xi1>, vector<8x128xf32>
    %261 = arith.select %256, %18, %8 : vector<8x128xi1>, vector<8x128xf32>
    %262 = arith.select %256, %38, %28 : vector<8x128xi1>, vector<8x128xf32>
    %263 = arith.select %256, %20, %10 : vector<8x128xi1>, vector<8x128xf32>
    %264 = arith.select %256, %40, %30 : vector<8x128xi1>, vector<8x128xf32>
    %265 = arith.select %256, %22, %12 : vector<8x128xi1>, vector<8x128xf32>
    %266 = arith.select %256, %42, %32 : vector<8x128xi1>, vector<8x128xf32>
    %267 = arith.select %256, %12, %22 : vector<8x128xi1>, vector<8x128xf32>
    %268 = arith.select %256, %32, %42 : vector<8x128xi1>, vector<8x128xf32>
    %269 = arith.subf %257, %258 : vector<8x128xf32>
    %270 = arith.subf %259, %260 : vector<8x128xf32>
    %271 = arith.subf %265, %266 : vector<8x128xf32>
    %272 = arith.subf %267, %268 : vector<8x128xf32>
    %273 = arith.addf %261, %262 : vector<8x128xf32>
    %274 = arith.mulf %261, %262 : vector<8x128xf32>
    %275 = math.sqrt %274 : vector<8x128xf32>
    %cst_166 = arith.constant 2.000000e+00 : f32
    %276 = vector.broadcast %cst_166 : f32 to vector<8x128xf32>
    %277 = arith.mulf %276, %275 : vector<8x128xf32>
    %278 = arith.subf %273, %277 : vector<8x128xf32>
    %279 = arith.addf %263, %264 : vector<8x128xf32>
    %280 = arith.mulf %263, %264 : vector<8x128xf32>
    %281 = math.sqrt %280 : vector<8x128xf32>
    %cst_167 = arith.constant 2.000000e+00 : f32
    %282 = vector.broadcast %cst_167 : f32 to vector<8x128xf32>
    %283 = arith.mulf %282, %281 : vector<8x128xf32>
    %284 = arith.subf %279, %283 : vector<8x128xf32>
    %285 = arith.mulf %269, %269 : vector<8x128xf32>
    %286 = arith.mulf %270, %270 : vector<8x128xf32>
    %287 = arith.addf %285, %286 : vector<8x128xf32>
    %288 = arith.addf %287, %278 : vector<8x128xf32>
    %289 = arith.addf %288, %284 : vector<8x128xf32>
    %cst_168 = arith.constant 5.000000e+00 : f32
    %290 = vector.broadcast %cst_168 : f32 to vector<8x128xf32>
    %291 = arith.mulf %290, %289 : vector<8x128xf32>
    %292 = arith.mulf %271, %271 : vector<8x128xf32>
    %293 = arith.addf %291, %292 : vector<8x128xf32>
    %294 = arith.mulf %272, %272 : vector<8x128xf32>
    %cst_169 = arith.constant 5.000000e-01 : f32
    %295 = vector.broadcast %cst_169 : f32 to vector<8x128xf32>
    %296 = arith.mulf %295, %294 : vector<8x128xf32>
    %297 = arith.addf %293, %296 : vector<8x128xf32>
    %cst_170 = arith.constant 0.000000e+00 : f32
    %298 = vector.broadcast %cst_170 : f32 to vector<8x128xf32>
    %299 = arith.select %44, %297, %298 : vector<8x128xi1>, vector<8x128xf32>
    %c0_171 = arith.constant 0 : index
    %c0_172 = arith.constant 0 : index
    %300 = vector.load %arg5[%c0_171, %c0_172] : memref<8x128xf32, #tpu.memory_space<vmem>>, vector<8x128xf32>
    %301 = arith.addf %190, %199 : vector<8x128xf32>
    %302 = arith.addf %301, %299 : vector<8x128xf32>
    %303 = arith.addf %300, %302 : vector<8x128xf32>
    %c0_173 = arith.constant 0 : index
    %c0_174 = arith.constant 0 : index
    %304 = vector.load %arg5[%c0_173, %c0_174] : memref<8x128xf32, #tpu.memory_space<vmem>>, vector<8x128xf32>
    tpu.vector_store %arg5[%c0_173, %c0_174], %303 {strides = array<i32>} : memref<8x128xf32, #tpu.memory_space<vmem>>, vector<8x128xf32>,
    %c0_i32_175 = arith.constant 0 : i32
    %305 = arith.cmpi eq, %arg1, %c0_i32_175 : i32
    %306 = arith.extui %305 : i1 to i32
    %c0_i32_176 = arith.constant 0 : i32
    %307 = arith.cmpi ne, %306, %c0_i32_176 : i32
    scf.if %307 {
      %c0_177 = arith.constant 0 : index
      %c0_178 = arith.constant 0 : index
      %308 = vector.load %arg5[%c0_177, %c0_178] : memref<8x128xf32, #tpu.memory_space<vmem>>, vector<8x128xf32>
      %cst_179 = arith.constant dense<0.000000e+00> : vector<128xf32>
      %309 = vector.multi_reduction <add>, %308, %cst_179 [0] : vector<8x128xf32> to vector<128xf32>
      %310 = vector.shape_cast %309 : vector<128xf32> to vector<1x128xf32>
      %311 = vector.shape_cast %310 : vector<1x128xf32> to vector<1x128xf32>
      %312 = vector.broadcast %311 : vector<1x128xf32> to vector<8x128xf32>
      %c0_180 = arith.constant 0 : index
      %c0_181 = arith.constant 0 : index
      %313 = vector.load %arg4[%c0_180, %c0_181] : memref<8x128xf32, #tpu.memory_space<vmem>>, vector<8x128xf32>
      tpu.vector_store %arg4[%c0_180, %c0_181], %312 {strides = array<i32>} : memref<8x128xf32, #tpu.memory_space<vmem>>, vector<8x128xf32>,
    } else {
    }
    return
  }
  func.func @transform_0(%arg0: i32, %arg1: i32) -> (i32, i32, i32) {
    %c1_i32 = arith.constant 1 : i32
    %0 = arith.muli %arg0, %c1_i32 : i32
    %1 = arith.addi %0, %arg1 : i32
    %c0_i32 = arith.constant 0 : i32
    %c0_i32_0 = arith.constant 0 : i32
    %c0_i32_1 = arith.constant 0 : i32
    return %c0_i32, %1, %c0_i32_0 : i32, i32, i32
  }
  func.func @transform_1(%arg0: i32, %arg1: i32) -> (i32, i32, i32) {
    %c1_i32 = arith.constant 1 : i32
    %0 = arith.muli %arg0, %c1_i32 : i32
    %1 = arith.addi %0, %arg1 : i32
    %c0_i32 = arith.constant 0 : i32
    %c0_i32_0 = arith.constant 0 : i32
    %c0_i32_1 = arith.constant 0 : i32
    return %c0_i32, %1, %c0_i32_0 : i32, i32, i32
  }
  func.func @transform_2(%arg0: i32, %arg1: i32) -> (i32, i32) {
    %c0_i32 = arith.constant 0 : i32
    %c0_i32_0 = arith.constant 0 : i32
    return %arg0, %c0_i32 : i32, i32
  }
}

</mosaic_0001>

<llo_original>
// kernel: tpu_custom_call.1
$region0: #{tpu_custom_call.1}
  #allocation0 [shape = 'u32[]', space=smem, size = 0x4, offset = 0x4, fixed_abs, tag = 'smem constant byte address 0x4 - core index']
  #allocation1 [shape = 'u32[144,128]{1,0:T(1,128)}', space=vmem, size = 0x12000, scoped, tag = 'internal scratch']
  #allocation2 [shape = 'f32[8,128]{1,0:T(8,128)}', space=vmem, size = 0x1000, scoped, tag = 'scratch operand']
  %s0 = inlined_call_operand.hbm [shape: f32[30,8,128], index: 0, kind: input, shape index: {}]
  %s1 = inlined_call_operand.hbm [shape: f32[30,8,128], index: 1, kind: input, shape index: {}]
  %s2 = inlined_call_operand.hbm [shape: f32[8,128], index: 2, kind: output, shape index: {}]
  %s3 = sld [smem:[#allocation0]]
  $region34: #{tpu_custom_call.1} parent=0
    _
  %s5 = ssub.s32 1, %s3
  %s6 = scalar_select 0, %s5, %s3
  $region1: #{tpu_custom_call.1} parent=0
    #allocation3 [shape = 'u8[122880]{0}', space=vmem, size = 0x1e000, scoped, tag = 'input window, operand 0, single buffered']
    #allocation4 [shape = 's32[1]{0}', space=sflag, size = 0x4, scoped, tag = 'scoped memory for tpu_custom_call.1']
    #allocation5 [shape = 's32[1]{0}', space=sflag, size = 0x4, scoped, tag = 'scoped memory for tpu_custom_call.1']
    #allocation6 [shape = 'u8[122880]{0}', space=vmem, size = 0x1e000, scoped, tag = 'input window, operand 1, single buffered']
    #allocation7 [shape = 's32[1]{0}', space=sflag, size = 0x4, scoped, tag = 'scoped memory for tpu_custom_call.1']
    #allocation8 [shape = 'u8[4096]{0}', space=vmem, size = 0x1000, scoped, tag = 'output window, operand 0, single buffered']
    %7 = vsyncpa [#allocation4], 0
    %8 = vsyncpa [#allocation7], 0
    %9 = vsyncpa [#allocation5], 0
    // Predicated region
    $region2: #{tpu_custom_call.1} parent=1 // pred_check
      _
    $region3: #{tpu_custom_call.1} parent=1 // pred_check_branch
      %11 = sbr.rel (0) target = $region5
    $region4: #{tpu_custom_call.1} parent=1 // pred_region
      %s12 = sadd.s32 0, 0
      %s14 = ssub.s32 3840, 3840
      %15 = vsyncadd [#allocation4], %s14
      %s16 = smul.addr %s12, 128
      %s17 = scalar_lea.hbm %s0, %s16
      %s18 = sshll.u32 [#allocation3], 4
      %s19 = int_to_ptr.vmem [resolvable:$true] %s18
      %24 = dma.hbm_to_vmem [thread:$0]  %s17, 3840, %s19, [#allocation4], 128, 128, 8
    $region5: #{tpu_custom_call.1} parent=1 // pred_fallthru
      _
    // Predicated region
    $region6: #{tpu_custom_call.1} parent=1 // pred_check
      _
    $region7: #{tpu_custom_call.1} parent=1 // pred_check_branch
      %26 = sbr.rel (0) target = $region9
    $region8: #{tpu_custom_call.1} parent=1 // pred_region
      %s27 = sadd.s32 0, 0
      %s29 = ssub.s32 3840, 3840
      %30 = vsyncadd [#allocation7], %s29
      %s31 = smul.addr %s27, 128
      %s32 = scalar_lea.hbm %s1, %s31
      %s33 = sshll.u32 [#allocation6], 4
      %s34 = int_to_ptr.vmem [resolvable:$true] %s33
      %39 = dma.hbm_to_vmem [thread:$0]  %s32, 3840, %s34, [#allocation7], 128, 128, 8
    $region9: #{tpu_custom_call.1} parent=1 // pred_fallthru
      _
    // Predicated region
    $region10: #{tpu_custom_call.1} parent=1 // pred_check
      _
    $region11: #{tpu_custom_call.1} parent=1 // pred_check_branch
      %41 = sbr.rel (0) target = $region13
    $region12: #{tpu_custom_call.1} parent=1 // pred_region
      %42 = dma.done [#allocation4], 3840
    $region13: #{tpu_custom_call.1} parent=1 // pred_fallthru
      _
    // Predicated region
    $region14: #{tpu_custom_call.1} parent=1 // pred_check
      _
    $region15: #{tpu_custom_call.1} parent=1 // pred_check_branch
      %44 = sbr.rel (0) target = $region17
    $region16: #{tpu_custom_call.1} parent=1 // pred_region
      %45 = dma.done [#allocation7], 3840
    $region17: #{tpu_custom_call.1} parent=1 // pred_fallthru
      _
    %s46 = sadd.s32 0, 0
    %s47 = sadd.s32 0, 0
    %p48 = scmp.eq.s32.totalorder 0, 0
    // Predicated region
    $region18: #{tpu_custom_call.1} parent=1 // pred_check
      %p49 = pneg %p48
    $region19: #{tpu_custom_call.1} parent=1 // pred_check_branch
      %51 = sbr.rel (%p49) target = $region21
    $region20: #{tpu_custom_call.1} parent=1 // pred_region
      %52 = vst [vmem:[#allocation2] sm:$0xff] 0.0
    $region21: #{tpu_custom_call.1} parent=1 // pred_fallthru
      _
    %v53 = vld [vmem:[#allocation6] sm:$0xff]
    %s54 = scalar_lea.vmem [#allocation6], 8
    %v55 = vld [vmem:[%s54] sm:$0xff]
    %s56 = scalar_lea.vmem [#allocation6], 16
    %v57 = vld [vmem:[%s56] sm:$0xff]
    %s58 = scalar_lea.vmem [#allocation6], 24
    %v59 = vld [vmem:[%s58] sm:$0xff]
    %s60 = scalar_lea.vmem [#allocation6], 32
    %v61 = vld [vmem:[%s60] sm:$0xff]
    %s62 = scalar_lea.vmem [#allocation6], 40
    %v63 = vld [vmem:[%s62] sm:$0xff]
    %s64 = scalar_lea.vmem [#allocation6], 48
    %v65 = vld [vmem:[%s64] sm:$0xff]
    %s66 = scalar_lea.vmem [#allocation6], 56
    %v67 = vld [vmem:[%s66] sm:$0xff]
    %s68 = scalar_lea.vmem [#allocation6], 64
    %v69 = vld [vmem:[%s68] sm:$0xff]
    %s70 = scalar_lea.vmem [#allocation6], 72
    %v71 = vld [vmem:[%s70] sm:$0xff]
    %v72 = vld [vmem:[#allocation3] sm:$0xff]
    %s73 = scalar_lea.vmem [#allocation3], 8
    %v74 = vld [vmem:[%s73] sm:$0xff]
    %s75 = scalar_lea.vmem [#allocation3], 16
    %v76 = vld [vmem:[%s75] sm:$0xff]
    %s77 = scalar_lea.vmem [#allocation3], 24
    %v78 = vld [vmem:[%s77] sm:$0xff]
    %s79 = scalar_lea.vmem [#allocation3], 32
    %v80 = vld [vmem:[%s79] sm:$0xff]
    %s81 = scalar_lea.vmem [#allocation3], 40
    %v82 = vld [vmem:[%s81] sm:$0xff]
    %s83 = scalar_lea.vmem [#allocation3], 48
    %v84 = vld [vmem:[%s83] sm:$0xff]
    %s85 = scalar_lea.vmem [#allocation3], 56
    %v86 = vld [vmem:[%s85] sm:$0xff]
    %s87 = scalar_lea.vmem [#allocation3], 64
    %v88 = vld [vmem:[%s87] sm:$0xff]
    %s89 = scalar_lea.vmem [#allocation3], 72
    %v90 = vld [vmem:[%s89] sm:$0xff]
    %vm91 = vcmp.gt.f32.partialorder %v61, 0.0
    %vm92 = vcmp.eq.f32.partialorder %v61, 0.0
    %v93 = vsel %vm91, 1, 0
    %v94 = vcvt.s32.f32 %v93
    %s95 = scalar_lea.vmem [#allocation6], 80
    %v96 = vld [vmem:[%s95] sm:$0xff]
    %s97 = scalar_lea.vmem [#allocation3], 80
    %v98 = vld [vmem:[%s97] sm:$0xff]
    %v99 = vsub.f32 %v96, %v98
    %v100 = vmul.f32 %v99, %v99
    %v101 = vadd.f32 %v100, 0.0
    %s102 = scalar_lea.vmem [#allocation6], 88
    %v103 = vld [vmem:[%s102] sm:$0xff]
    %s104 = scalar_lea.vmem [#allocation3], 88
    %v105 = vld [vmem:[%s104] sm:$0xff]
    %v106 = vsub.f32 %v103, %v105
    %v107 = vmul.f32 %v106, %v106
    %v108 = vadd.f32 %v101, %v107
    %s109 = scalar_lea.vmem [#allocation6], 96
    %v110 = vld [vmem:[%s109] sm:$0xff]
    %s111 = scalar_lea.vmem [#allocation3], 96
    %v112 = vld [vmem:[%s111] sm:$0xff]
    %v113 = vsub.f32 %v110, %v112
    %v114 = vmul.f32 %v113, %v113
    %v115 = vadd.f32 %v108, %v114
    %s116 = scalar_lea.vmem [#allocation6], 104
    %v117 = vld [vmem:[%s116] sm:$0xff]
    %s118 = scalar_lea.vmem [#allocation3], 104
    %v119 = vld [vmem:[%s118] sm:$0xff]
    %v120 = vsub.f32 %v117, %v119
    %v121 = vmul.f32 %v120, %v120
    %v122 = vadd.f32 %v115, %v121
    %s123 = scalar_lea.vmem [#allocation6], 112
    %v124 = vld [vmem:[%s123] sm:$0xff]
    %s125 = scalar_lea.vmem [#allocation3], 112
    %v126 = vld [vmem:[%s125] sm:$0xff]
    %v127 = vsub.f32 %v124, %v126
    %v128 = vmul.f32 %v127, %v127
    %v129 = vadd.f32 %v122, %v128
    %s130 = scalar_lea.vmem [#allocation6], 120
    %v131 = vld [vmem:[%s130] sm:$0xff]
    %s132 = scalar_lea.vmem [#allocation3], 120
    %v133 = vld [vmem:[%s132] sm:$0xff]
    %v134 = vsub.f32 %v131, %v133
    %v135 = vmul.f32 %v134, %v134
    %v136 = vadd.f32 %v129, %v135
    %s137 = scalar_lea.vmem [#allocation6], 128
    %v138 = vld [vmem:[%s137] sm:$0xff]
    %s139 = scalar_lea.vmem [#allocation3], 128
    %v140 = vld [vmem:[%s139] sm:$0xff]
    %v141 = vsub.f32 %v138, %v140
    %v142 = vmul.f32 %v141, %v141
    %v143 = vadd.f32 %v136, %v142
    %s144 = scalar_lea.vmem [#allocation6], 136
    %v145 = vld [vmem:[%s144] sm:$0xff]
    %s146 = scalar_lea.vmem [#allocation3], 136
    %v147 = vld [vmem:[%s146] sm:$0xff]
    %v148 = vsub.f32 %v145, %v147
    %v149 = vmul.f32 %v148, %v148
    %v150 = vadd.f32 %v143, %v149
    %s151 = scalar_lea.vmem [#allocation6], 144
    %v152 = vld [vmem:[%s151] sm:$0xff]
    %s153 = scalar_lea.vmem [#allocation3], 144
    %v154 = vld [vmem:[%s153] sm:$0xff]
    %v155 = vsub.f32 %v152, %v154
    %v156 = vmul.f32 %v155, %v155
    %v157 = vadd.f32 %v150, %v156
    %s158 = scalar_lea.vmem [#allocation6], 152
    %v159 = vld [vmem:[%s158] sm:$0xff]
    %s160 = scalar_lea.vmem [#allocation3], 152
    %v161 = vld [vmem:[%s160] sm:$0xff]
    %v162 = vsub.f32 %v159, %v161
    %v163 = vmul.f32 %v162, %v162
    %v164 = vadd.f32 %v157, %v163
    %s165 = scalar_lea.vmem [#allocation6], 160
    %v166 = vld [vmem:[%s165] sm:$0xff]
    %s167 = scalar_lea.vmem [#allocation3], 160
    %v168 = vld [vmem:[%s167] sm:$0xff]
    %v169 = vsub.f32 %v166, %v168
    %v170 = vmul.f32 %v169, %v169
    %v171 = vadd.f32 %v164, %v170
    %s172 = scalar_lea.vmem [#allocation6], 168
    %v173 = vld [vmem:[%s172] sm:$0xff]
    %s174 = scalar_lea.vmem [#allocation3], 168
    %v175 = vld [vmem:[%s174] sm:$0xff]
    %v176 = vsub.f32 %v173, %v175
    %v177 = vmul.f32 %v176, %v176
    %v178 = vadd.f32 %v171, %v177
    %s179 = scalar_lea.vmem [#allocation6], 176
    %v180 = vld [vmem:[%s179] sm:$0xff]
    %s181 = scalar_lea.vmem [#allocation3], 176
    %v182 = vld [vmem:[%s181] sm:$0xff]
    %v183 = vsub.f32 %v180, %v182
    %v184 = vmul.f32 %v183, %v183
    %v185 = vadd.f32 %v178, %v184
    %s186 = scalar_lea.vmem [#allocation6], 184
    %v187 = vld [vmem:[%s186] sm:$0xff]
    %s188 = scalar_lea.vmem [#allocation3], 184
    %v189 = vld [vmem:[%s188] sm:$0xff]
    %v190 = vsub.f32 %v187, %v189
    %v191 = vmul.f32 %v190, %v190
    %v192 = vadd.f32 %v185, %v191
    %s193 = scalar_lea.vmem [#allocation6], 192
    %v194 = vld [vmem:[%s193] sm:$0xff]
    %s195 = scalar_lea.vmem [#allocation3], 192
    %v196 = vld [vmem:[%s195] sm:$0xff]
    %v197 = vsub.f32 %v194, %v196
    %v198 = vmul.f32 %v197, %v197
    %v199 = vadd.f32 %v192, %v198
    %s200 = scalar_lea.vmem [#allocation6], 200
    %v201 = vld [vmem:[%s200] sm:$0xff]
    %s202 = scalar_lea.vmem [#allocation3], 200
    %v203 = vld [vmem:[%s202] sm:$0xff]
    %v204 = vsub.f32 %v201, %v203
    %v205 = vmul.f32 %v204, %v204
    %v206 = vadd.f32 %v199, %v205
    %s207 = scalar_lea.vmem [#allocation6], 208
    %v208 = vld [vmem:[%s207] sm:$0xff]
    %s209 = scalar_lea.vmem [#allocation3], 208
    %v210 = vld [vmem:[%s209] sm:$0xff]
    %v211 = vsub.f32 %v208, %v210
    %v212 = vmul.f32 %v211, %v211
    %v213 = vadd.f32 %v206, %v212
    %s214 = scalar_lea.vmem [#allocation6], 216
    %v215 = vld [vmem:[%s214] sm:$0xff]
    %s216 = scalar_lea.vmem [#allocation3], 216
    %v217 = vld [vmem:[%s216] sm:$0xff]
    %v218 = vsub.f32 %v215, %v217
    %v219 = vmul.f32 %v218, %v218
    %v220 = vadd.f32 %v213, %v219
    %s221 = scalar_lea.vmem [#allocation6], 224
    %v222 = vld [vmem:[%s221] sm:$0xff]
    %s223 = scalar_lea.vmem [#allocation3], 224
    %v224 = vld [vmem:[%s223] sm:$0xff]
    %v225 = vsub.f32 %v222, %v224
    %v226 = vmul.f32 %v225, %v225
    %v227 = vadd.f32 %v220, %v226
    %s228 = scalar_lea.vmem [#allocation6], 232
    %v229 = vld [vmem:[%s228] sm:$0xff]
    %s230 = scalar_lea.vmem [#allocation3], 232
    %v231 = vld [vmem:[%s230] sm:$0xff]
    %v232 = vsub.f32 %v229, %v231
    %v233 = vmul.f32 %v232, %v232
    %v234 = vadd.f32 %v227, %v233
    %v235 = vmul.f32 %v234, %v94
    %v236 = vsub.f32 %v80, %v61
    %v237 = vsub.f32 %v90, %v71
    %v238 = vmul.f32 %v236, %v236
    %v239 = vmul.f32 %v237, %v237
    %v240 = vadd.f32 %v238, %v239
    %v241 = vmul.f32 %v240, 0.5
    %v242 = vsel %vm92, %v241, 0.0
    %v243 = vmul.f32 %v76, 0.5
    %v244 = vsub.f32 %v72, %v243
    %v245 = vadd.f32 %v72, %v243
    %v246 = vmul.f32 %v78, 0.5
    %v247 = vsub.f32 %v74, %v246
    %v248 = vmul.f32 %v86, 0.5
    %v249 = vsub.f32 %v82, %v248
    %v250 = vadd.f32 %v82, %v248
    %v251 = vmul.f32 %v88, 0.5
    %v252 = vsub.f32 %v84, %v251
    %v253 = vmul.f32 %v57, 0.5
    %v254 = vsub.f32 %v53, %v253
    %v255 = vadd.f32 %v53, %v253
    %v256 = vmul.f32 %v59, 0.5
    %v257 = vsub.f32 %v55, %v256
    %v258 = vmin.f32 %v245, %v255
    %v259 = vmax.f32 %v244, %v254
    %v260 = vsub.f32 %v258, %v259
    %v261 = vmin.f32 %v247, %v257
    %v262 = vmax.f32 %v247, %v257
    %v263 = vsub.f32 %v261, %v262
    %v264 = vmul.f32 %v260, %v263
    %v265 = vmin.f32 %v250, %v255
    %v266 = vmax.f32 %v249, %v254
    %v267 = vsub.f32 %v265, %v266
    %v268 = vmin.f32 %v252, %v257
    %v269 = vmax.f32 %v252, %v257
    %v270 = vsub.f32 %v268, %v269
    %v271 = vmul.f32 %v267, %v270
    %v272 = vsub.f32 %v245, %v244
    %v273 = vsub.f32 %v247, %v247
    %v274 = vmul.f32 %v272, %v273
    %v275 = vadd.f32 %v274, 100.0
    %v276 = vsub.f32 %v255, %v254
    %v277 = vsub.f32 %v257, %v257
    %v278 = vmul.f32 %v276, %v277
    %v279 = vadd.f32 %v278, 100.0
    %v280 = vadd.f32 %v279, %v275
    %v281 = vsub.f32 %v280, %v264
    %v282 = vrcp.pop %v281
    %v283 = vmul.f32 %v264, %v282
    %v284 = vsub.f32 %v280, %v271
    %v285 = vrcp.pop %v284
    %v286 = vmul.f32 %v271, %v285
    %vm287 = vcmp.gt.f32.partialorder %v286, %v283
    %v288 = vsel %vm287, %v63, %v53
    %v289 = vsel %vm287, %v82, %v72
    %v290 = vsel %vm287, %v65, %v55
    %v291 = vsel %vm287, %v84, %v74
    %v292 = vsel %vm287, %v67, %v57
    %v293 = vsel %vm287, %v86, %v76
    %v294 = vsel %vm287, %v69, %v59
    %v295 = vsel %vm287, %v88, %v78
    %v296 = vsel %vm287, %v71, %v61
    %v297 = vsel %vm287, %v90, %v80
    %v298 = vsel %vm287, %v61, %v71
    %v299 = vsel %vm287, %v80, %v90
    %v300 = vsub.f32 %v288, %v289
    %v301 = vsub.f32 %v290, %v291
    %v302 = vsub.f32 %v296, %v297
    %v303 = vsub.f32 %v298, %v299
    %v304 = vadd.f32 %v292, %v293
    %v305 = vmul.f32 %v292, %v293
    %v306 = vrsqrt.pop %v305
    %v307 = vmul.f32 %v305, %v306
    %vm308 = vcmp.eq.f32.partialorder %v305, inf
    %v309 = vsel %vm308, %v305, %v307
    %vm310 = vcmp.eq.f32.partialorder %v305, 0.0
    %v311 = vand.u32 %v305, 2147483648
    %v312 = vsel %vm310, %v311, %v309
    %v313 = vmul.f32 %v312, 2.0
    %v314 = vsub.f32 %v304, %v313
    %v315 = vadd.f32 %v294, %v295
    %v316 = vmul.f32 %v294, %v295
    %v317 = vrsqrt.pop %v316
    %v318 = vmul.f32 %v316, %v317
    %vm319 = vcmp.eq.f32.partialorder %v316, inf
    %v320 = vsel %vm319, %v316, %v318
    %vm321 = vcmp.eq.f32.partialorder %v316, 0.0
    %v322 = vand.u32 %v316, 2147483648
    %v323 = vsel %vm321, %v322, %v320
    %v324 = vmul.f32 %v323, 2.0
    %v325 = vsub.f32 %v315, %v324
    %v326 = vmul.f32 %v300, %v300
    %v327 = vmul.f32 %v301, %v301
    %v328 = vadd.f32 %v326, %v327
    %v329 = vadd.f32 %v328, %v314
    %v330 = vadd.f32 %v329, %v325
    %v331 = vmul.f32 %v330, 5.0
    %v332 = vmul.f32 %v302, %v302
    %v333 = vadd.f32 %v331, %v332
    %v334 = vmul.f32 %v303, %v303
    %v335 = vmul.f32 %v334, 0.5
    %v336 = vadd.f32 %v333, %v335
    %v337 = vsel %vm91, %v336, 0.0
    %v338 = vld [vmem:[#allocation2] sm:$0xff]
    %v339 = vadd.f32 %v235, %v242
    %v340 = vadd.f32 %v339, %v337
    %v341 = vadd.f32 %v338, %v340
    %342 = vst [vmem:[#allocation2] sm:$0xff] %v341
    // Predicated region
    $region22: #{tpu_custom_call.1} parent=1 // pred_check
      %p343 = pneg %p48
    $region23: #{tpu_custom_call.1} parent=1 // pred_check_branch
      %345 = sbr.rel (%p343) target = $region25
    $region24: #{tpu_custom_call.1} parent=1 // pred_region
      %v346 = vld [vmem:[#allocation2] sm:$0xff]
      %v347 = vrot.slane %v346, 4
      %v348 = vadd.f32 %v346, %v347
      %v349 = vrot.slane %v348, 2
      %v350 = vadd.f32 %v348, %v349
      %v351 = vrot.slane %v350, 1
      %v352 = vadd.f32 %v350, %v351
      %353 = vst [vmem:[#allocation8] sm:$0xff] %v352
    $region25: #{tpu_custom_call.1} parent=1 // pred_fallthru
      _
    // Predicated region
    $region26: #{tpu_custom_call.1} parent=1 // pred_check
      _
    $region27: #{tpu_custom_call.1} parent=1 // pred_check_branch
      %355 = sbr.rel (0) target = $region29
    $region28: #{tpu_custom_call.1} parent=1 // pred_region
      %s357 = ssub.s32 128, 128
      %358 = vsyncadd [#allocation5], %s357
      %s360 = sshll.u32 [#allocation8], 4
      %s361 = int_to_ptr.vmem [resolvable:$true] %s360
      %363 = dma.vmem_to_hbm [thread:$0]  %s361, 128, %s2, [#allocation5]
    $region29: #{tpu_custom_call.1} parent=1 // pred_fallthru
      _
    // Predicated region
    $region30: #{tpu_custom_call.1} parent=1 // pred_check
      _
    $region31: #{tpu_custom_call.1} parent=1 // pred_check_branch
      %365 = sbr.rel (0) target = $region33
    $region32: #{tpu_custom_call.1} parent=1 // pred_region
      %366 = dma.done [#allocation5], 128
    $region33: #{tpu_custom_call.1} parent=1 // pred_fallthru
      _
    %367 = vsyncpa [#allocation4], 1
    %368 = vsyncpa [#allocation7], 1
    %369 = vsyncpa [#allocation5], 1

</llo_original>
